<compile_context>
chip_gen: v7x
topology: tpu7x:2x2x1
jax: 0.10.0
libtpu: 0.0.40
codegen_flags: <defaults>
</compile_context>

<pallas_src>
import jax
import jax.numpy as jnp
from jax.experimental import pallas as pl
from jax.experimental.pallas import tpu as pltpu

LANES = 128  # vreg lane width; all feature dims are zero-padded to this


def gcn_e_kernel(x_ref, adj_ref, w_ref, b_ref, o_ref):
    """Fused 3-layer GCN forward. Single invocation, everything VMEM-resident.

    x_ref:   (N, 128)       zero-padded node features
    adj_ref: (N, N)         dense row-normalized adjacency
    w_ref:   (3, 128, 128)  zero-padded weights, stacked per layer
    b_ref:   (3, 1, 128)    zero-padded biases, stacked per layer
    o_ref:   (N, 128)       lane-dense output (padded cols are exactly 0)
    """
    adj = adj_ref[...]          # loaded once, reused by all three layers
    h = x_ref[...]
    for l in range(3):          # static unroll over the 3 layers
        # support = h @ W_l   (MXU, f32 accumulate)
        support = jnp.dot(h, w_ref[l], preferred_element_type=jnp.float32)
        # out = adj @ support + b_l
        out = jnp.dot(adj, support, preferred_element_type=jnp.float32) + b_ref[l]
        # leaky_relu, negative slope 0.25
        h = jnp.where(out > 0, out, 0.25 * out)
    o_ref[...] = h.astype(o_ref.dtype)   # single lane-dense (N, 128) store


def _pad2(a, rows, cols):
    r, c = a.shape
    return jnp.pad(a, ((0, rows - r), (0, cols - c)))


def gcn_e_forward(x, adj, params):
    """GCN_E.forward in eval mode (dropout = identity), one fused pallas_call."""
    (w1, b1), (w2, b2), (w3, b3) = params
    N = x.shape[0]
    f_out = w3.shape[1]

    # Lane-dense, zero-padded operands (exactness argued in the header).
    x_pad = _pad2(x.astype(jnp.float32), N, LANES)
    w_stack = jnp.stack(
        [_pad2(w.astype(jnp.float32), LANES, LANES) for w in (w1, w2, w3)])
    b_stack = jnp.stack(
        [jnp.pad(b.astype(jnp.float32), (0, LANES - b.shape[0])).reshape(1, LANES)
         for b in (b1, b2, b3)])
    adj_f32 = adj.astype(jnp.float32)

    # Accurate (tiny) cost hint for the surrounding-graph scheduler.
    flops = 2 * 3 * (N * LANES * LANES + N * N * LANES)
    bytes_accessed = 4 * (x_pad.size + adj_f32.size + w_stack.size
                          + b_stack.size + N * LANES)

    vmem_spec = pl.BlockSpec(memory_space=pltpu.MemorySpace.VMEM)
    out_pad = pl.pallas_call(
        gcn_e_kernel,
        out_shape=jax.ShapeDtypeStruct((N, LANES), jnp.float32),
        in_specs=[vmem_spec, vmem_spec, vmem_spec, vmem_spec],
        out_specs=vmem_spec,
        cost_estimate=pl.CostEstimate(
            flops=flops, transcendentals=0, bytes_accessed=bytes_accessed),
    )(x_pad, adj_f32, w_stack, b_stack)

    # Slice the lane padding back off outside the kernel.
    return out_pad[:, :f_out]


def xavier_normal(key, fan_in, fan_out):
    std = (2.0 / (fan_in + fan_out)) ** 0.5
    return std * jax.random.normal(key, (fan_in, fan_out), dtype=jnp.float32)


def init_gcn_e_params(key, in_dim, hgcn_dim):
    dims = [in_dim] + list(hgcn_dim)
    params = []
    keys = jax.random.split(key, len(hgcn_dim))
    for k, (fi, fo) in zip(keys, zip(dims[:-1], dims[1:])):
        w = xavier_normal(k, fi, fo)
        b = jnp.zeros((fo,), dtype=jnp.float32)  # bias.data.fill_(0.0)
        params.append((w, b))
    return params


def gcn_e_reference(x, adj, params):
    for w, b in params:
        h = adj @ (x @ w) + b
        x = jnp.where(h > 0, h, 0.25 * h)
    return x


if __name__ == "__main__":
    key = jax.random.PRNGKey(0)
    k_x, k_a, k_p = jax.random.split(key, 3)

    N = 64          # number of graph nodes
    in_dim = 16
    hgcn_dim = (32, 64, 32)

    x = jax.random.normal(k_x, (N, in_dim), dtype=jnp.float32)

    # dense row-normalized adjacency (stand-in for the sparse adj)
    a_raw = jax.random.uniform(k_a, (N, N), dtype=jnp.float32)
    a_raw = (a_raw > 0.7).astype(jnp.float32) + jnp.eye(N, dtype=jnp.float32)
    adj = a_raw / jnp.sum(a_raw, axis=1, keepdims=True)

    params = init_gcn_e_params(k_p, in_dim, hgcn_dim)

    out = gcn_e_forward(x, adj, params)
    out = jax.block_until_ready(out)

    ref = gcn_e_reference(x, adj, params)
    assert out.shape == (N, hgcn_dim[-1])
    assert jnp.allclose(out, ref, atol=1e-4, rtol=1e-4)

    print("KERNEL_OK")
</pallas_src>

<mosaic_0001>
module attributes {stable_mosaic.version = 11 : i64} {
  func.func @gcn_e_kernel(%arg0: memref<64x128xf32, #tpu.memory_space<vmem>>, %arg1: memref<64x64xf32, #tpu.memory_space<vmem>>, %arg2: memref<3x128x128xf32, #tpu.memory_space<vmem>>, %arg3: memref<3x1x128xf32, #tpu.memory_space<vmem>>, %arg4: memref<64x128xf32, #tpu.memory_space<vmem>>) attributes {dimension_semantics = [], scalar_prefetch = 0 : i64, scratch_operands = 0 : i64, tpu.core_type = #tpu.core_type<tc>} {
    %c0 = arith.constant 0 : index
    %c0_0 = arith.constant 0 : index
    %0 = vector.load %arg1[%c0, %c0_0] : memref<64x64xf32, #tpu.memory_space<vmem>>, vector<64x64xf32>
    %c0_1 = arith.constant 0 : index
    %c0_2 = arith.constant 0 : index
    %1 = vector.load %arg0[%c0_1, %c0_2] : memref<64x128xf32, #tpu.memory_space<vmem>>, vector<64x128xf32>
    %c0_3 = arith.constant 0 : index
    %c0_4 = arith.constant 0 : index
    %c0_5 = arith.constant 0 : index
    %2 = vector.load %arg2[%c0_3, %c0_4, %c0_5] : memref<3x128x128xf32, #tpu.memory_space<vmem>>, vector<1x128x128xf32>
    %3 = vector.shape_cast %2 : vector<1x128x128xf32> to vector<128x128xf32>
    %cst = arith.constant dense<0.000000e+00> : vector<64x128xf32>
    %4 = tpu.matmul %1, %3, %cst {dimension_numbers = #tpu.dot_dimension_numbers<[1], [0], [0], [1], [0, 0, 1, 1], [], []>} : vector<64x128xf32>, vector<128x128xf32>, vector<64x128xf32> -> vector<64x128xf32>
    %cst_6 = arith.constant dense<0.000000e+00> : vector<64x128xf32>
    %5 = tpu.matmul %0, %4, %cst_6 {dimension_numbers = #tpu.dot_dimension_numbers<[1], [0], [0], [1], [0, 0, 1, 1], [], []>} : vector<64x64xf32>, vector<64x128xf32>, vector<64x128xf32> -> vector<64x128xf32>
    %c0_7 = arith.constant 0 : index
    %c0_8 = arith.constant 0 : index
    %c0_9 = arith.constant 0 : index
    %6 = vector.load %arg3[%c0_7, %c0_8, %c0_9] : memref<3x1x128xf32, #tpu.memory_space<vmem>>, vector<1x1x128xf32>
    %7 = vector.shape_cast %6 : vector<1x1x128xf32> to vector<1x128xf32>
    %8 = vector.broadcast %7 : vector<1x128xf32> to vector<64x128xf32>
    %9 = arith.addf %5, %8 : vector<64x128xf32>
    %cst_10 = arith.constant 0.000000e+00 : f32
    %10 = vector.broadcast %cst_10 : f32 to vector<64x128xf32>
    %11 = arith.cmpf ogt, %9, %10 : vector<64x128xf32>
    %cst_11 = arith.constant 2.500000e-01 : f32
    %12 = vector.broadcast %cst_11 : f32 to vector<64x128xf32>
    %13 = arith.mulf %12, %9 : vector<64x128xf32>
    %14 = arith.select %11, %9, %13 : vector<64x128xi1>, vector<64x128xf32>
    %c1 = arith.constant 1 : index
    %c0_12 = arith.constant 0 : index
    %c0_13 = arith.constant 0 : index
    %15 = vector.load %arg2[%c1, %c0_12, %c0_13] : memref<3x128x128xf32, #tpu.memory_space<vmem>>, vector<1x128x128xf32>
    %16 = vector.shape_cast %15 : vector<1x128x128xf32> to vector<128x128xf32>
    %cst_14 = arith.constant dense<0.000000e+00> : vector<64x128xf32>
    %17 = tpu.matmul %14, %16, %cst_14 {dimension_numbers = #tpu.dot_dimension_numbers<[1], [0], [0], [1], [0, 0, 1, 1], [], []>} : vector<64x128xf32>, vector<128x128xf32>, vector<64x128xf32> -> vector<64x128xf32>
    %cst_15 = arith.constant dense<0.000000e+00> : vector<64x128xf32>
    %18 = tpu.matmul %0, %17, %cst_15 {dimension_numbers = #tpu.dot_dimension_numbers<[1], [0], [0], [1], [0, 0, 1, 1], [], []>} : vector<64x64xf32>, vector<64x128xf32>, vector<64x128xf32> -> vector<64x128xf32>
    %c1_16 = arith.constant 1 : index
    %c0_17 = arith.constant 0 : index
    %c0_18 = arith.constant 0 : index
    %19 = vector.load %arg3[%c1_16, %c0_17, %c0_18] : memref<3x1x128xf32, #tpu.memory_space<vmem>>, vector<1x1x128xf32>
    %20 = vector.shape_cast %19 : vector<1x1x128xf32> to vector<1x128xf32>
    %21 = vector.broadcast %20 : vector<1x128xf32> to vector<64x128xf32>
    %22 = arith.addf %18, %21 : vector<64x128xf32>
    %cst_19 = arith.constant 0.000000e+00 : f32
    %23 = vector.broadcast %cst_19 : f32 to vector<64x128xf32>
    %24 = arith.cmpf ogt, %22, %23 : vector<64x128xf32>
    %cst_20 = arith.constant 2.500000e-01 : f32
    %25 = vector.broadcast %cst_20 : f32 to vector<64x128xf32>
    %26 = arith.mulf %25, %22 : vector<64x128xf32>
    %27 = arith.select %24, %22, %26 : vector<64x128xi1>, vector<64x128xf32>
    %c2 = arith.constant 2 : index
    %c0_21 = arith.constant 0 : index
    %c0_22 = arith.constant 0 : index
    %28 = vector.load %arg2[%c2, %c0_21, %c0_22] : memref<3x128x128xf32, #tpu.memory_space<vmem>>, vector<1x128x128xf32>
    %29 = vector.shape_cast %28 : vector<1x128x128xf32> to vector<128x128xf32>
    %cst_23 = arith.constant dense<0.000000e+00> : vector<64x128xf32>
    %30 = tpu.matmul %27, %29, %cst_23 {dimension_numbers = #tpu.dot_dimension_numbers<[1], [0], [0], [1], [0, 0, 1, 1], [], []>} : vector<64x128xf32>, vector<128x128xf32>, vector<64x128xf32> -> vector<64x128xf32>
    %cst_24 = arith.constant dense<0.000000e+00> : vector<64x128xf32>
    %31 = tpu.matmul %0, %30, %cst_24 {dimension_numbers = #tpu.dot_dimension_numbers<[1], [0], [0], [1], [0, 0, 1, 1], [], []>} : vector<64x64xf32>, vector<64x128xf32>, vector<64x128xf32> -> vector<64x128xf32>
    %c2_25 = arith.constant 2 : index
    %c0_26 = arith.constant 0 : index
    %c0_27 = arith.constant 0 : index
    %32 = vector.load %arg3[%c2_25, %c0_26, %c0_27] : memref<3x1x128xf32, #tpu.memory_space<vmem>>, vector<1x1x128xf32>
    %33 = vector.shape_cast %32 : vector<1x1x128xf32> to vector<1x128xf32>
    %34 = vector.broadcast %33 : vector<1x128xf32> to vector<64x128xf32>
    %35 = arith.addf %31, %34 : vector<64x128xf32>
    %cst_28 = arith.constant 0.000000e+00 : f32
    %36 = vector.broadcast %cst_28 : f32 to vector<64x128xf32>
    %37 = arith.cmpf ogt, %35, %36 : vector<64x128xf32>
    %cst_29 = arith.constant 2.500000e-01 : f32
    %38 = vector.broadcast %cst_29 : f32 to vector<64x128xf32>
    %39 = arith.mulf %38, %35 : vector<64x128xf32>
    %40 = arith.select %37, %35, %39 : vector<64x128xi1>, vector<64x128xf32>
    %c0_30 = arith.constant 0 : index
    %c0_31 = arith.constant 0 : index
    %41 = vector.load %arg4[%c0_30, %c0_31] : memref<64x128xf32, #tpu.memory_space<vmem>>, vector<64x128xf32>
    tpu.vector_store %arg4[%c0_30, %c0_31], %40 {strides = array<i32>} : memref<64x128xf32, #tpu.memory_space<vmem>>, vector<64x128xf32>,
    return
  }
}

</mosaic_0001>

<llo_original>
// kernel: tpu_custom_call.1
$region0: #{tpu_custom_call.1}
  #allocation0 [shape = 'u32[]', space=smem, size = 0x4, offset = 0x4, fixed_abs, tag = 'smem constant byte address 0x4 - core index']
  #allocation1 [shape = 'u32[144,128]{1,0:T(1,128)}', space=vmem, size = 0x12000, scoped, tag = 'internal scratch']
  %s0 = inlined_call_operand.hbm [shape: f32[64,128], index: 0, kind: input, shape index: {}]
  %s1 = inlined_call_operand.hbm [shape: f32[64,64], index: 1, kind: input, shape index: {}]
  %s2 = inlined_call_operand.hbm [shape: f32[3,128,128], index: 2, kind: input, shape index: {}]
  %s3 = inlined_call_operand.vmem [shape: f32[3,1,128], index: 3, kind: input, shape index: {}]
  %s4 = inlined_call_operand.hbm [shape: f32[64,128], index: 4, kind: output, shape index: {}]
  %s5 = sld [smem:[#allocation0]]
  $region38: #{tpu_custom_call.1} parent=0
    _
  %s7 = ssub.s32 1, %s5
  %s8 = scalar_select 0, %s7, %s5
  $region1: #{tpu_custom_call.1} parent=0
    #allocation2 [shape = 'u8[32768]{0}', space=vmem, size = 0x8000, scoped, tag = 'input window, operand 0, single buffered']
    #allocation3 [shape = 's32[1]{0}', space=sflag, size = 0x4, scoped, tag = 'scoped memory for tpu_custom_call.1']
    #allocation4 [shape = 's32[1]{0}', space=sflag, size = 0x4, scoped, tag = 'scoped memory for tpu_custom_call.1']
    #allocation5 [shape = 'u8[32768]{0}', space=vmem, size = 0x8000, scoped, tag = 'input window, operand 1, single buffered']
    #allocation6 [shape = 's32[1]{0}', space=sflag, size = 0x4, scoped, tag = 'scoped memory for tpu_custom_call.1']
    #allocation7 [shape = 'u8[196608]{0}', space=vmem, size = 0x30000, scoped, tag = 'input window, operand 2, single buffered']
    #allocation8 [shape = 'u8[32768]{0}', space=vmem, size = 0x8000, scoped, tag = 'output window, operand 0, single buffered']
    %9 = vsyncpa [#allocation3], 0
    %10 = vsyncpa [#allocation6], 0
    %11 = vsyncpa [#allocation4], 0
    // Predicated region
    $region2: #{tpu_custom_call.1} parent=1 // pred_check
      _
    $region3: #{tpu_custom_call.1} parent=1 // pred_check_branch
      %13 = sbr.rel (0) target = $region5
    $region4: #{tpu_custom_call.1} parent=1 // pred_region
      %s15 = ssub.s32 1024, 1024
      %16 = vsyncadd [#allocation3], %s15
      %s17 = sshll.u32 [#allocation2], 4
      %s18 = int_to_ptr.vmem [resolvable:$true] %s17
      %23 = dma.hbm_to_vmem [thread:$0]  %s0, 1024, %s18, [#allocation3], 128, 128, 8
    $region5: #{tpu_custom_call.1} parent=1 // pred_fallthru
      _
    // Predicated region
    $region6: #{tpu_custom_call.1} parent=1 // pred_check
      _
    $region7: #{tpu_custom_call.1} parent=1 // pred_check_branch
      %25 = sbr.rel (0) target = $region9
    $region8: #{tpu_custom_call.1} parent=1 // pred_region
      %s27 = ssub.s32 1024, 1024
      %28 = vsyncadd [#allocation6], %s27
      %s29 = sshll.u32 [#allocation5], 4
      %s30 = int_to_ptr.vmem [resolvable:$true] %s29
      %35 = dma.hbm_to_vmem [thread:$0]  %s1, 1024, %s30, [#allocation6], 128, 128, 8
    $region9: #{tpu_custom_call.1} parent=1 // pred_fallthru
      _
    // Predicated region
    $region10: #{tpu_custom_call.1} parent=1 // pred_check
      _
    $region11: #{tpu_custom_call.1} parent=1 // pred_check_branch
      %37 = sbr.rel (0) target = $region13
    $region12: #{tpu_custom_call.1} parent=1 // pred_region
      %s39 = ssub.s32 6144, 6144
      %40 = vsyncadd [#allocation6], %s39
      %s41 = sshll.u32 [#allocation7], 4
      %s42 = int_to_ptr.vmem [resolvable:$true] %s41
      %47 = dma.hbm_to_vmem [thread:$0]  %s2, 6144, %s42, [#allocation6], 128, 128, 8
    $region13: #{tpu_custom_call.1} parent=1 // pred_fallthru
      _
    // Predicated region
    $region14: #{tpu_custom_call.1} parent=1 // pred_check
      _
    $region15: #{tpu_custom_call.1} parent=1 // pred_check_branch
      %49 = sbr.rel (0) target = $region17
    $region16: #{tpu_custom_call.1} parent=1 // pred_region
      _
    $region17: #{tpu_custom_call.1} parent=1 // pred_fallthru
      _
    // Predicated region
    $region18: #{tpu_custom_call.1} parent=1 // pred_check
      _
    $region19: #{tpu_custom_call.1} parent=1 // pred_check_branch
      %51 = sbr.rel (0) target = $region21
    $region20: #{tpu_custom_call.1} parent=1 // pred_region
      %52 = dma.done [#allocation3], 1024
    $region21: #{tpu_custom_call.1} parent=1 // pred_fallthru
      _
    // Predicated region
    $region22: #{tpu_custom_call.1} parent=1 // pred_check
      _
    $region23: #{tpu_custom_call.1} parent=1 // pred_check_branch
      %54 = sbr.rel (0) target = $region25
    $region24: #{tpu_custom_call.1} parent=1 // pred_region
      %55 = dma.done [#allocation6], 1024
    $region25: #{tpu_custom_call.1} parent=1 // pred_fallthru
      _
    // Predicated region
    $region26: #{tpu_custom_call.1} parent=1 // pred_check
      _
    $region27: #{tpu_custom_call.1} parent=1 // pred_check_branch
      %57 = sbr.rel (0) target = $region29
    $region28: #{tpu_custom_call.1} parent=1 // pred_region
      %58 = dma.done [#allocation6], 6144
    $region29: #{tpu_custom_call.1} parent=1 // pred_fallthru
      _
    %v59 = vld [vmem:[#allocation5] sm:$0xff]
    %v60 = vld [vmem:[#allocation5 + $0x8] sm:$0xff]
    %v61 = vld [vmem:[#allocation5 + $0x10] sm:$0xff]
    %v62 = vld [vmem:[#allocation5 + $0x18] sm:$0xff]
    %v63 = vld [vmem:[#allocation5 + $0x20] sm:$0xff]
    %v64 = vld [vmem:[#allocation5 + $0x28] sm:$0xff]
    %v65 = vld [vmem:[#allocation5 + $0x30] sm:$0xff]
    %v66 = vld [vmem:[#allocation5 + $0x38] sm:$0xff]
    %v67 = vld [vmem:[#allocation2] sm:$0xff]
    %v68 = vld [vmem:[#allocation2 + $0x8] sm:$0xff]
    %v69 = vld [vmem:[#allocation2 + $0x10] sm:$0xff]
    %v70 = vld [vmem:[#allocation2 + $0x18] sm:$0xff]
    %v71 = vld [vmem:[#allocation2 + $0x20] sm:$0xff]
    %v72 = vld [vmem:[#allocation2 + $0x28] sm:$0xff]
    %v73 = vld [vmem:[#allocation2 + $0x30] sm:$0xff]
    %v74 = vld [vmem:[#allocation2 + $0x38] sm:$0xff]
    %v75 = vld [vmem:[#allocation7] sm:$0xff]
    %v76 = vld [vmem:[#allocation7 + $0x8] sm:$0xff]
    %v77 = vld [vmem:[#allocation7 + $0x10] sm:$0xff]
    %v78 = vld [vmem:[#allocation7 + $0x18] sm:$0xff]
    %v79 = vld [vmem:[#allocation7 + $0x20] sm:$0xff]
    %v80 = vld [vmem:[#allocation7 + $0x28] sm:$0xff]
    %v81 = vld [vmem:[#allocation7 + $0x30] sm:$0xff]
    %v82 = vld [vmem:[#allocation7 + $0x38] sm:$0xff]
    %v83 = vld [vmem:[#allocation7 + $0x40] sm:$0xff]
    %v84 = vld [vmem:[#allocation7 + $0x48] sm:$0xff]
    %v85 = vld [vmem:[#allocation7 + $0x50] sm:$0xff]
    %v86 = vld [vmem:[#allocation7 + $0x58] sm:$0xff]
    %v87 = vld [vmem:[#allocation7 + $0x60] sm:$0xff]
    %v88 = vld [vmem:[#allocation7 + $0x68] sm:$0xff]
    %v89 = vld [vmem:[#allocation7 + $0x70] sm:$0xff]
    %v90 = vld [vmem:[#allocation7 + $0x78] sm:$0xff]
    %91 = vmatprep.subr.mxu0 0.0
    %92 = vmatpush1.msra.mxu0 %v75
    %93 = vmatprep.subr.mxu0 0.0
    %94 = vmatpush1.msra.mxu0 %v76
    %95 = vmatprep.subr.mxu0 0.0
    %96 = vmatpush1.msra.mxu0 %v77
    %97 = vmatprep.subr.mxu0 0.0
    %98 = vmatpush1.msra.mxu0 %v78
    %99 = vmatprep.subr.mxu0 0.0
    %100 = vmatpush1.msra.mxu0 %v79
    %101 = vmatprep.subr.mxu0 0.0
    %102 = vmatpush1.msra.mxu0 %v80
    %103 = vmatprep.subr.mxu0 0.0
    %104 = vmatpush1.msra.mxu0 %v81
    %105 = vmatprep.subr.mxu0 0.0
    %106 = vmatpush1.msra.mxu0 %v82
    %107 = vmatprep.subr.mxu0 0.0
    %108 = vmatpush1.msra.mxu0 %v83
    %109 = vmatprep.subr.mxu0 0.0
    %110 = vmatpush1.msra.mxu0 %v84
    %111 = vmatprep.subr.mxu0 0.0
    %112 = vmatpush1.msra.mxu0 %v85
    %113 = vmatprep.subr.mxu0 0.0
    %114 = vmatpush1.msra.mxu0 %v86
    %115 = vmatprep.subr.mxu0 0.0
    %116 = vmatpush1.msra.mxu0 %v87
    %117 = vmatprep.subr.mxu0 0.0
    %118 = vmatpush1.msra.mxu0 %v88
    %119 = vmatprep.subr.mxu0 0.0
    %120 = vmatpush1.msra.mxu0 %v89
    %121 = vmatprep.subr.mxu0 0.0
    %122 = vmatpush1.msra.mxu0 %v90
    %123 = vmatprep.subr.mxu0 0.0
    %124 = vmatpush1.msra.mxu0 0.0
    %125 = vmatprep.subr.mxu0 0.0
    %126 = vmatpush1.msra.mxu0 0.0
    %127 = vmatprep.subr.mxu0 0.0
    %128 = vmatpush1.msra.mxu0 0.0
    %129 = vmatprep.subr.mxu0 0.0
    %130 = vmatpush1.msra.mxu0 0.0
    %131 = vmatprep.subr.mxu0 0.0
    %132 = vmatpush1.msra.mxu0 0.0
    %133 = vmatprep.subr.mxu0 0.0
    %134 = vmatpush1.msra.mxu0 0.0
    %135 = vmatprep.subr.mxu0 0.0
    %136 = vmatpush1.msra.mxu0 0.0
    %137 = vmatprep.subr.mxu0 0.0
    %138 = vmatpush1.msra.mxu0 0.0
    %139 = vmatprep.subr.mxu0 0.0
    %140 = vmatpush1.msra.mxu0 0.0
    %141 = vmatprep.subr.mxu0 0.0
    %142 = vmatpush1.msra.mxu0 0.0
    %143 = vmatprep.subr.mxu0 0.0
    %144 = vmatpush1.msra.mxu0 0.0
    %145 = vmatprep.subr.mxu0 0.0
    %146 = vmatpush1.msra.mxu0 0.0
    %147 = vmatprep.subr.mxu0 0.0
    %148 = vmatpush1.msra.mxu0 0.0
    %149 = vmatprep.subr.mxu0 0.0
    %150 = vmatpush1.msra.mxu0 0.0
    %151 = vmatprep.subr.mxu0 0.0
    %152 = vmatpush1.msra.mxu0 0.0
    %153 = vmatprep.subr.mxu0 0.0
    %154 = vmatpush1.msra.mxu0 0.0
    %155 = vmatprep.mubr.f32.mxu0 0.0
    %156 = vmatmul.mubr.f32.gmra.mrb[0].mxu0 %v67
    %v157 = vpop.f32.mrb[0].mxu0
    %v158 = vadd.f32 0.0, %v157
    %v159 = vpop.f32.mrb[0].mxu0
    %160 = vmatprep.mubr.f32.mxu0 0.0
    %161 = vmatmul.mubr.f32.gmra.mrb[0].mxu0 %v68
    %v162 = vpop.f32.mrb[0].mxu0
    %v163 = vadd.f32 0.0, %v162
    %v164 = vpop.f32.mrb[0].mxu0
    %165 = vmatprep.mubr.f32.mxu0 0.0
    %166 = vmatmul.mubr.f32.gmra.mrb[0].mxu0 %v69
    %v167 = vpop.f32.mrb[0].mxu0
    %v168 = vadd.f32 0.0, %v167
    %v169 = vpop.f32.mrb[0].mxu0
    %170 = vmatprep.mubr.f32.mxu0 0.0
    %171 = vmatmul.mubr.f32.gmra.mrb[0].mxu0 %v70
    %v172 = vpop.f32.mrb[0].mxu0
    %v173 = vadd.f32 0.0, %v172
    %v174 = vpop.f32.mrb[0].mxu0
    %175 = vmatprep.mubr.f32.mxu0 0.0
    %176 = vmatmul.mubr.f32.gmra.mrb[0].mxu0 %v71
    %v177 = vpop.f32.mrb[0].mxu0
    %v178 = vadd.f32 0.0, %v177
    %v179 = vpop.f32.mrb[0].mxu0
    %180 = vmatprep.mubr.f32.mxu0 0.0
    %181 = vmatmul.mubr.f32.gmra.mrb[0].mxu0 %v72
    %v182 = vpop.f32.mrb[0].mxu0
    %v183 = vadd.f32 0.0, %v182
    %v184 = vpop.f32.mrb[0].mxu0
    %185 = vmatprep.mubr.f32.mxu0 0.0
    %186 = vmatmul.mubr.f32.gmra.mrb[0].mxu0 %v73
    %v187 = vpop.f32.mrb[0].mxu0
    %v188 = vadd.f32 0.0, %v187
    %v189 = vpop.f32.mrb[0].mxu0
    %190 = vmatprep.mubr.f32.mxu0 0.0
    %191 = vmatmul.mubr.f32.gmra.mrb[0].mxu0 %v74
    %v192 = vpop.f32.mrb[0].mxu0
    %v193 = vadd.f32 0.0, %v192
    %v194 = vpop.f32.mrb[0].mxu0
    %195 = vdwg.mxu0
    %v196 = vld [vmem:[%s3] sm:$0x1]
    %v198 = vlaneseq
    %v199 = vshrl.u32 %v198, 7
    %v200 = vsub.s32 0, %v199
    %v201 = vrot.slane %v196, %v200
    %vm203 = vcmask 523264
    %v205 = vsel %vm203, %v59, 0
    %v208 = vsel %vm203, %v60, 0
    %v211 = vsel %vm203, %v61, 0
    %v214 = vsel %vm203, %v62, 0
    %v217 = vsel %vm203, %v63, 0
    %v220 = vsel %vm203, %v64, 0
    %v223 = vsel %vm203, %v65, 0
    %v226 = vsel %vm203, %v66, 0
    %228 = vmatprep.subr.mxu0 0.0
    %229 = vmatpush1.msra.mxu0 %v158
    %230 = vmatprep.subr.mxu0 0.0
    %231 = vmatpush1.msra.mxu0 %v163
    %232 = vmatprep.subr.mxu0 0.0
    %233 = vmatpush1.msra.mxu0 %v168
    %234 = vmatprep.subr.mxu0 0.0
    %235 = vmatpush1.msra.mxu0 %v173
    %236 = vmatprep.subr.mxu0 0.0
    %237 = vmatpush1.msra.mxu0 %v178
    %238 = vmatprep.subr.mxu0 0.0
    %239 = vmatpush1.msra.mxu0 %v183
    %240 = vmatprep.subr.mxu0 0.0
    %241 = vmatpush1.msra.mxu0 %v188
    %242 = vmatprep.subr.mxu0 0.0
    %243 = vmatpush1.msra.mxu0 %v193
    %244 = vmatprep.subr.mxu0 0.0
    %245 = vmatpush1.msra.mxu0 0.0
    %246 = vmatprep.subr.mxu0 0.0
    %247 = vmatpush1.msra.mxu0 0.0
    %248 = vmatprep.subr.mxu0 0.0
    %249 = vmatpush1.msra.mxu0 0.0
    %250 = vmatprep.subr.mxu0 0.0
    %251 = vmatpush1.msra.mxu0 0.0
    %252 = vmatprep.subr.mxu0 0.0
    %253 = vmatpush1.msra.mxu0 0.0
    %254 = vmatprep.subr.mxu0 0.0
    %255 = vmatpush1.msra.mxu0 0.0
    %256 = vmatprep.subr.mxu0 0.0
    %257 = vmatpush1.msra.mxu0 0.0
    %258 = vmatprep.subr.mxu0 0.0
    %259 = vmatpush1.msra.mxu0 0.0
    %260 = vmatprep.subr.mxu0 0.0
    %261 = vmatpush1.msra.mxu0 0.0
    %262 = vmatprep.subr.mxu0 0.0
    %263 = vmatpush1.msra.mxu0 0.0
    %264 = vmatprep.subr.mxu0 0.0
    %265 = vmatpush1.msra.mxu0 0.0
    %266 = vmatprep.subr.mxu0 0.0
    %267 = vmatpush1.msra.mxu0 0.0
    %268 = vmatprep.subr.mxu0 0.0
    %269 = vmatpush1.msra.mxu0 0.0
    %270 = vmatprep.subr.mxu0 0.0
    %271 = vmatpush1.msra.mxu0 0.0
    %272 = vmatprep.subr.mxu0 0.0
    %273 = vmatpush1.msra.mxu0 0.0
    %274 = vmatprep.subr.mxu0 0.0
    %275 = vmatpush1.msra.mxu0 0.0
    %276 = vmatprep.subr.mxu0 0.0
    %277 = vmatpush1.msra.mxu0 0.0
    %278 = vmatprep.subr.mxu0 0.0
    %279 = vmatpush1.msra.mxu0 0.0
    %280 = vmatprep.subr.mxu0 0.0
    %281 = vmatpush1.msra.mxu0 0.0
    %282 = vmatprep.subr.mxu0 0.0
    %283 = vmatpush1.msra.mxu0 0.0
    %284 = vmatprep.subr.mxu0 0.0
    %285 = vmatpush1.msra.mxu0 0.0
    %286 = vmatprep.subr.mxu0 0.0
    %287 = vmatpush1.msra.mxu0 0.0
    %288 = vmatprep.subr.mxu0 0.0
    %289 = vmatpush1.msra.mxu0 0.0
    %290 = vmatprep.subr.mxu0 0.0
    %291 = vmatpush1.msra.mxu0 0.0
    %292 = vmatprep.mubr.f32.mxu0 0.0
    %293 = vmatmul.mubr.f32.gmra.mrb[0].mxu0 %v205
    %v294 = vpop.f32.mrb[0].mxu0
    %v295 = vadd.f32 %v201, %v294
    %v296 = vpop.f32.mrb[0].mxu0
    %297 = vmatprep.mubr.f32.mxu0 0.0
    %298 = vmatmul.mubr.f32.gmra.mrb[0].mxu0 %v208
    %v299 = vpop.f32.mrb[0].mxu0
    %v300 = vadd.f32 %v201, %v299
    %v301 = vpop.f32.mrb[0].mxu0
    %302 = vmatprep.mubr.f32.mxu0 0.0
    %303 = vmatmul.mubr.f32.gmra.mrb[0].mxu0 %v211
    %v304 = vpop.f32.mrb[0].mxu0
    %v305 = vadd.f32 %v201, %v304
    %v306 = vpop.f32.mrb[0].mxu0
    %307 = vmatprep.mubr.f32.mxu0 0.0
    %308 = vmatmul.mubr.f32.gmra.mrb[0].mxu0 %v214
    %v309 = vpop.f32.mrb[0].mxu0
    %v310 = vadd.f32 %v201, %v309
    %v311 = vpop.f32.mrb[0].mxu0
    %312 = vmatprep.mubr.f32.mxu0 0.0
    %313 = vmatmul.mubr.f32.gmra.mrb[0].mxu0 %v217
    %v314 = vpop.f32.mrb[0].mxu0
    %v315 = vadd.f32 %v201, %v314
    %v316 = vpop.f32.mrb[0].mxu0
    %317 = vmatprep.mubr.f32.mxu0 0.0
    %318 = vmatmul.mubr.f32.gmra.mrb[0].mxu0 %v220
    %v319 = vpop.f32.mrb[0].mxu0
    %v320 = vadd.f32 %v201, %v319
    %v321 = vpop.f32.mrb[0].mxu0
    %322 = vmatprep.mubr.f32.mxu0 0.0
    %323 = vmatmul.mubr.f32.gmra.mrb[0].mxu0 %v223
    %v324 = vpop.f32.mrb[0].mxu0
    %v325 = vadd.f32 %v201, %v324
    %v326 = vpop.f32.mrb[0].mxu0
    %327 = vmatprep.mubr.f32.mxu0 0.0
    %328 = vmatmul.mubr.f32.gmra.mrb[0].mxu0 %v226
    %v329 = vpop.f32.mrb[0].mxu0
    %v330 = vadd.f32 %v201, %v329
    %v331 = vpop.f32.mrb[0].mxu0
    %332 = vdwg.mxu0
    %vm333 = vcmp.gt.f32.partialorder %v295, 0.0
    %vm334 = vcmp.gt.f32.partialorder %v300, 0.0
    %vm335 = vcmp.gt.f32.partialorder %v305, 0.0
    %vm336 = vcmp.gt.f32.partialorder %v310, 0.0
    %vm337 = vcmp.gt.f32.partialorder %v315, 0.0
    %vm338 = vcmp.gt.f32.partialorder %v320, 0.0
    %vm339 = vcmp.gt.f32.partialorder %v325, 0.0
    %vm340 = vcmp.gt.f32.partialorder %v330, 0.0
    %v341 = vmul.f32 %v295, 0.25
    %v342 = vmul.f32 %v300, 0.25
    %v343 = vmul.f32 %v305, 0.25
    %v344 = vmul.f32 %v310, 0.25
    %v345 = vmul.f32 %v315, 0.25
    %v346 = vmul.f32 %v320, 0.25
    %v347 = vmul.f32 %v325, 0.25
    %v348 = vmul.f32 %v330, 0.25
    %v349 = vsel %vm333, %v295, %v341
    %v350 = vsel %vm334, %v300, %v342
    %v351 = vsel %vm335, %v305, %v343
    %v352 = vsel %vm336, %v310, %v344
    %v353 = vsel %vm337, %v315, %v345
    %v354 = vsel %vm338, %v320, %v346
    %v355 = vsel %vm339, %v325, %v347
    %v356 = vsel %vm340, %v330, %v348
    %s357 = scalar_lea.vmem [#allocation7], 128
    %v358 = vld [vmem:[%s357] sm:$0xff]
    %v359 = vld [vmem:[%s357 + $0x8] sm:$0xff]
    %v360 = vld [vmem:[%s357 + $0x10] sm:$0xff]
    %v361 = vld [vmem:[%s357 + $0x18] sm:$0xff]
    %v362 = vld [vmem:[%s357 + $0x20] sm:$0xff]
    %v363 = vld [vmem:[%s357 + $0x28] sm:$0xff]
    %v364 = vld [vmem:[%s357 + $0x30] sm:$0xff]
    %v365 = vld [vmem:[%s357 + $0x38] sm:$0xff]
    %v366 = vld [vmem:[%s357 + $0x40] sm:$0xff]
    %v367 = vld [vmem:[%s357 + $0x48] sm:$0xff]
    %v368 = vld [vmem:[%s357 + $0x50] sm:$0xff]
    %v369 = vld [vmem:[%s357 + $0x58] sm:$0xff]
    %v370 = vld [vmem:[%s357 + $0x60] sm:$0xff]
    %v371 = vld [vmem:[%s357 + $0x68] sm:$0xff]
    %v372 = vld [vmem:[%s357 + $0x70] sm:$0xff]
    %v373 = vld [vmem:[%s357 + $0x78] sm:$0xff]
    %374 = vmatprep.subr.mxu0 0.0
    %375 = vmatpush1.msra.mxu0 %v358
    %376 = vmatprep.subr.mxu0 0.0
    %377 = vmatpush1.msra.mxu0 %v359
    %378 = vmatprep.subr.mxu0 0.0
    %379 = vmatpush1.msra.mxu0 %v360
    %380 = vmatprep.subr.mxu0 0.0
    %381 = vmatpush1.msra.mxu0 %v361
    %382 = vmatprep.subr.mxu0 0.0
    %383 = vmatpush1.msra.mxu0 %v362
    %384 = vmatprep.subr.mxu0 0.0
    %385 = vmatpush1.msra.mxu0 %v363
    %386 = vmatprep.subr.mxu0 0.0
    %387 = vmatpush1.msra.mxu0 %v364
    %388 = vmatprep.subr.mxu0 0.0
    %389 = vmatpush1.msra.mxu0 %v365
    %390 = vmatprep.subr.mxu0 0.0
    %391 = vmatpush1.msra.mxu0 %v366
    %392 = vmatprep.subr.mxu0 0.0
    %393 = vmatpush1.msra.mxu0 %v367
    %394 = vmatprep.subr.mxu0 0.0
    %395 = vmatpush1.msra.mxu0 %v368
    %396 = vmatprep.subr.mxu0 0.0
    %397 = vmatpush1.msra.mxu0 %v369
    %398 = vmatprep.subr.mxu0 0.0
    %399 = vmatpush1.msra.mxu0 %v370
    %400 = vmatprep.subr.mxu0 0.0
    %401 = vmatpush1.msra.mxu0 %v371
    %402 = vmatprep.subr.mxu0 0.0
    %403 = vmatpush1.msra.mxu0 %v372
    %404 = vmatprep.subr.mxu0 0.0
    %405 = vmatpush1.msra.mxu0 %v373
    %406 = vmatprep.subr.mxu0 0.0
    %407 = vmatpush1.msra.mxu0 0.0
    %408 = vmatprep.subr.mxu0 0.0
    %409 = vmatpush1.msra.mxu0 0.0
    %410 = vmatprep.subr.mxu0 0.0
    %411 = vmatpush1.msra.mxu0 0.0
    %412 = vmatprep.subr.mxu0 0.0
    %413 = vmatpush1.msra.mxu0 0.0
    %414 = vmatprep.subr.mxu0 0.0
    %415 = vmatpush1.msra.mxu0 0.0
    %416 = vmatprep.subr.mxu0 0.0
    %417 = vmatpush1.msra.mxu0 0.0
    %418 = vmatprep.subr.mxu0 0.0
    %419 = vmatpush1.msra.mxu0 0.0
    %420 = vmatprep.subr.mxu0 0.0
    %421 = vmatpush1.msra.mxu0 0.0
    %422 = vmatprep.subr.mxu0 0.0
    %423 = vmatpush1.msra.mxu0 0.0
    %424 = vmatprep.subr.mxu0 0.0
    %425 = vmatpush1.msra.mxu0 0.0
    %426 = vmatprep.subr.mxu0 0.0
    %427 = vmatpush1.msra.mxu0 0.0
    %428 = vmatprep.subr.mxu0 0.0
    %429 = vmatpush1.msra.mxu0 0.0
    %430 = vmatprep.subr.mxu0 0.0
    %431 = vmatpush1.msra.mxu0 0.0
    %432 = vmatprep.subr.mxu0 0.0
    %433 = vmatpush1.msra.mxu0 0.0
    %434 = vmatprep.subr.mxu0 0.0
    %435 = vmatpush1.msra.mxu0 0.0
    %436 = vmatprep.subr.mxu0 0.0
    %437 = vmatpush1.msra.mxu0 0.0
    %438 = vmatprep.mubr.f32.mxu0 0.0
    %439 = vmatmul.mubr.f32.gmra.mrb[0].mxu0 %v349
    %v440 = vpop.f32.mrb[0].mxu0
    %v441 = vadd.f32 0.0, %v440
    %v442 = vpop.f32.mrb[0].mxu0
    %443 = vmatprep.mubr.f32.mxu0 0.0
    %444 = vmatmul.mubr.f32.gmra.mrb[0].mxu0 %v350
    %v445 = vpop.f32.mrb[0].mxu0
    %v446 = vadd.f32 0.0, %v445
    %v447 = vpop.f32.mrb[0].mxu0
    %448 = vmatprep.mubr.f32.mxu0 0.0
    %449 = vmatmul.mubr.f32.gmra.mrb[0].mxu0 %v351
    %v450 = vpop.f32.mrb[0].mxu0
    %v451 = vadd.f32 0.0, %v450
    %v452 = vpop.f32.mrb[0].mxu0
    %453 = vmatprep.mubr.f32.mxu0 0.0
    %454 = vmatmul.mubr.f32.gmra.mrb[0].mxu0 %v352
    %v455 = vpop.f32.mrb[0].mxu0
    %v456 = vadd.f32 0.0, %v455
    %v457 = vpop.f32.mrb[0].mxu0
    %458 = vmatprep.mubr.f32.mxu0 0.0
    %459 = vmatmul.mubr.f32.gmra.mrb[0].mxu0 %v353
    %v460 = vpop.f32.mrb[0].mxu0
    %v461 = vadd.f32 0.0, %v460
    %v462 = vpop.f32.mrb[0].mxu0
    %463 = vmatprep.mubr.f32.mxu0 0.0
    %464 = vmatmul.mubr.f32.gmra.mrb[0].mxu0 %v354
    %v465 = vpop.f32.mrb[0].mxu0
    %v466 = vadd.f32 0.0, %v465
    %v467 = vpop.f32.mrb[0].mxu0
    %468 = vmatprep.mubr.f32.mxu0 0.0
    %469 = vmatmul.mubr.f32.gmra.mrb[0].mxu0 %v355
    %v470 = vpop.f32.mrb[0].mxu0
    %v471 = vadd.f32 0.0, %v470
    %v472 = vpop.f32.mrb[0].mxu0
    %473 = vmatprep.mubr.f32.mxu0 0.0
    %474 = vmatmul.mubr.f32.gmra.mrb[0].mxu0 %v356
    %v475 = vpop.f32.mrb[0].mxu0
    %v476 = vadd.f32 0.0, %v475
    %v477 = vpop.f32.mrb[0].mxu0
    %478 = vdwg.mxu0
    %s479 = scalar_lea.vmem %s3, 1
    %v480 = vld [vmem:[%s479] sm:$0x1]
    %v482 = vlaneseq
    %v483 = vshrl.u32 %v482, 7
    %v484 = vsub.s32 0, %v483
    %v485 = vrot.slane %v480, %v484
    %487 = vmatprep.subr.mxu0 0.0
    %488 = vmatpush1.msra.mxu0 %v441
    %489 = vmatprep.subr.mxu0 0.0
    %490 = vmatpush1.msra.mxu0 %v446
    %491 = vmatprep.subr.mxu0 0.0
    %492 = vmatpush1.msra.mxu0 %v451
    %493 = vmatprep.subr.mxu0 0.0
    %494 = vmatpush1.msra.mxu0 %v456
    %495 = vmatprep.subr.mxu0 0.0
    %496 = vmatpush1.msra.mxu0 %v461
    %497 = vmatprep.subr.mxu0 0.0
    %498 = vmatpush1.msra.mxu0 %v466
    %499 = vmatprep.subr.mxu0 0.0
    %500 = vmatpush1.msra.mxu0 %v471
    %501 = vmatprep.subr.mxu0 0.0
    %502 = vmatpush1.msra.mxu0 %v476
    %503 = vmatprep.subr.mxu0 0.0
    %504 = vmatpush1.msra.mxu0 0.0
    %505 = vmatprep.subr.mxu0 0.0
    %506 = vmatpush1.msra.mxu0 0.0
    %507 = vmatprep.subr.mxu0 0.0
    %508 = vmatpush1.msra.mxu0 0.0
    %509 = vmatprep.subr.mxu0 0.0
    %510 = vmatpush1.msra.mxu0 0.0
    %511 = vmatprep.subr.mxu0 0.0
    %512 = vmatpush1.msra.mxu0 0.0
    %513 = vmatprep.subr.mxu0 0.0
    %514 = vmatpush1.msra.mxu0 0.0
    %515 = vmatprep.subr.mxu0 0.0
    %516 = vmatpush1.msra.mxu0 0.0
    %517 = vmatprep.subr.mxu0 0.0
    %518 = vmatpush1.msra.mxu0 0.0
    %519 = vmatprep.subr.mxu0 0.0
    %520 = vmatpush1.msra.mxu0 0.0
    %521 = vmatprep.subr.mxu0 0.0
    %522 = vmatpush1.msra.mxu0 0.0
    %523 = vmatprep.subr.mxu0 0.0
    %524 = vmatpush1.msra.mxu0 0.0
    %525 = vmatprep.subr.mxu0 0.0
    %526 = vmatpush1.msra.mxu0 0.0
    %527 = vmatprep.subr.mxu0 0.0
    %528 = vmatpush1.msra.mxu0 0.0
    %529 = vmatprep.subr.mxu0 0.0
    %530 = vmatpush1.msra.mxu0 0.0
    %531 = vmatprep.subr.mxu0 0.0
    %532 = vmatpush1.msra.mxu0 0.0
    %533 = vmatprep.subr.mxu0 0.0
    %534 = vmatpush1.msra.mxu0 0.0
    %535 = vmatprep.subr.mxu0 0.0
    %536 = vmatpush1.msra.mxu0 0.0
    %537 = vmatprep.subr.mxu0 0.0
    %538 = vmatpush1.msra.mxu0 0.0
    %539 = vmatprep.subr.mxu0 0.0
    %540 = vmatpush1.msra.mxu0 0.0
    %541 = vmatprep.subr.mxu0 0.0
    %542 = vmatpush1.msra.mxu0 0.0
    %543 = vmatprep.subr.mxu0 0.0
    %544 = vmatpush1.msra.mxu0 0.0
    %545 = vmatprep.subr.mxu0 0.0
    %546 = vmatpush1.msra.mxu0 0.0
    %547 = vmatprep.subr.mxu0 0.0
    %548 = vmatpush1.msra.mxu0 0.0
    %549 = vmatprep.subr.mxu0 0.0
    %550 = vmatpush1.msra.mxu0 0.0
    %551 = vmatprep.mubr.f32.mxu0 0.0
    %552 = vmatmul.mubr.f32.gmra.mrb[0].mxu0 %v205
    %v553 = vpop.f32.mrb[0].mxu0
    %v554 = vadd.f32 %v485, %v553
    %v555 = vpop.f32.mrb[0].mxu0
    %556 = vmatprep.mubr.f32.mxu0 0.0
    %557 = vmatmul.mubr.f32.gmra.mrb[0].mxu0 %v208
    %v558 = vpop.f32.mrb[0].mxu0
    %v559 = vadd.f32 %v485, %v558
    %v560 = vpop.f32.mrb[0].mxu0
    %561 = vmatprep.mubr.f32.mxu0 0.0
    %562 = vmatmul.mubr.f32.gmra.mrb[0].mxu0 %v211
    %v563 = vpop.f32.mrb[0].mxu0
    %v564 = vadd.f32 %v485, %v563
    %v565 = vpop.f32.mrb[0].mxu0
    %566 = vmatprep.mubr.f32.mxu0 0.0
    %567 = vmatmul.mubr.f32.gmra.mrb[0].mxu0 %v214
    %v568 = vpop.f32.mrb[0].mxu0
    %v569 = vadd.f32 %v485, %v568
    %v570 = vpop.f32.mrb[0].mxu0
    %571 = vmatprep.mubr.f32.mxu0 0.0
    %572 = vmatmul.mubr.f32.gmra.mrb[0].mxu0 %v217
    %v573 = vpop.f32.mrb[0].mxu0
    %v574 = vadd.f32 %v485, %v573
    %v575 = vpop.f32.mrb[0].mxu0
    %576 = vmatprep.mubr.f32.mxu0 0.0
    %577 = vmatmul.mubr.f32.gmra.mrb[0].mxu0 %v220
    %v578 = vpop.f32.mrb[0].mxu0
    %v579 = vadd.f32 %v485, %v578
    %v580 = vpop.f32.mrb[0].mxu0
    %581 = vmatprep.mubr.f32.mxu0 0.0
    %582 = vmatmul.mubr.f32.gmra.mrb[0].mxu0 %v223
    %v583 = vpop.f32.mrb[0].mxu0
    %v584 = vadd.f32 %v485, %v583
    %v585 = vpop.f32.mrb[0].mxu0
    %586 = vmatprep.mubr.f32.mxu0 0.0
    %587 = vmatmul.mubr.f32.gmra.mrb[0].mxu0 %v226
    %v588 = vpop.f32.mrb[0].mxu0
    %v589 = vadd.f32 %v485, %v588
    %v590 = vpop.f32.mrb[0].mxu0
    %591 = vdwg.mxu0
    %vm592 = vcmp.gt.f32.partialorder %v554, 0.0
    %vm593 = vcmp.gt.f32.partialorder %v559, 0.0
    %vm594 = vcmp.gt.f32.partialorder %v564, 0.0
    %vm595 = vcmp.gt.f32.partialorder %v569, 0.0
    %vm596 = vcmp.gt.f32.partialorder %v574, 0.0
    %vm597 = vcmp.gt.f32.partialorder %v579, 0.0
    %vm598 = vcmp.gt.f32.partialorder %v584, 0.0
    %vm599 = vcmp.gt.f32.partialorder %v589, 0.0
    %v600 = vmul.f32 %v554, 0.25
    %v601 = vmul.f32 %v559, 0.25
    %v602 = vmul.f32 %v564, 0.25
    %v603 = vmul.f32 %v569, 0.25
    %v604 = vmul.f32 %v574, 0.25
    %v605 = vmul.f32 %v579, 0.25
    %v606 = vmul.f32 %v584, 0.25
    %v607 = vmul.f32 %v589, 0.25
    %v608 = vsel %vm592, %v554, %v600
    %v609 = vsel %vm593, %v559, %v601
    %v610 = vsel %vm594, %v564, %v602
    %v611 = vsel %vm595, %v569, %v603
    %v612 = vsel %vm596, %v574, %v604
    %v613 = vsel %vm597, %v579, %v605
    %v614 = vsel %vm598, %v584, %v606
    %v615 = vsel %vm599, %v589, %v607
    %s616 = scalar_lea.vmem [#allocation7], 256
    %v617 = vld [vmem:[%s616] sm:$0xff]
    %v618 = vld [vmem:[%s616 + $0x8] sm:$0xff]
    %v619 = vld [vmem:[%s616 + $0x10] sm:$0xff]
    %v620 = vld [vmem:[%s616 + $0x18] sm:$0xff]
    %v621 = vld [vmem:[%s616 + $0x20] sm:$0xff]
    %v622 = vld [vmem:[%s616 + $0x28] sm:$0xff]
    %v623 = vld [vmem:[%s616 + $0x30] sm:$0xff]
    %v624 = vld [vmem:[%s616 + $0x38] sm:$0xff]
    %v625 = vld [vmem:[%s616 + $0x40] sm:$0xff]
    %v626 = vld [vmem:[%s616 + $0x48] sm:$0xff]
    %v627 = vld [vmem:[%s616 + $0x50] sm:$0xff]
    %v628 = vld [vmem:[%s616 + $0x58] sm:$0xff]
    %v629 = vld [vmem:[%s616 + $0x60] sm:$0xff]
    %v630 = vld [vmem:[%s616 + $0x68] sm:$0xff]
    %v631 = vld [vmem:[%s616 + $0x70] sm:$0xff]
    %v632 = vld [vmem:[%s616 + $0x78] sm:$0xff]
    %633 = vmatprep.subr.mxu0 0.0
    %634 = vmatpush1.msra.mxu0 %v617
    %635 = vmatprep.subr.mxu0 0.0
    %636 = vmatpush1.msra.mxu0 %v618
    %637 = vmatprep.subr.mxu0 0.0
    %638 = vmatpush1.msra.mxu0 %v619
    %639 = vmatprep.subr.mxu0 0.0
    %640 = vmatpush1.msra.mxu0 %v620
    %641 = vmatprep.subr.mxu0 0.0
    %642 = vmatpush1.msra.mxu0 %v621
    %643 = vmatprep.subr.mxu0 0.0
    %644 = vmatpush1.msra.mxu0 %v622
    %645 = vmatprep.subr.mxu0 0.0
    %646 = vmatpush1.msra.mxu0 %v623
    %647 = vmatprep.subr.mxu0 0.0
    %648 = vmatpush1.msra.mxu0 %v624
    %649 = vmatprep.subr.mxu0 0.0
    %650 = vmatpush1.msra.mxu0 %v625
    %651 = vmatprep.subr.mxu0 0.0
    %652 = vmatpush1.msra.mxu0 %v626
    %653 = vmatprep.subr.mxu0 0.0
    %654 = vmatpush1.msra.mxu0 %v627
    %655 = vmatprep.subr.mxu0 0.0
    %656 = vmatpush1.msra.mxu0 %v628
    %657 = vmatprep.subr.mxu0 0.0
    %658 = vmatpush1.msra.mxu0 %v629
    %659 = vmatprep.subr.mxu0 0.0
    %660 = vmatpush1.msra.mxu0 %v630
    %661 = vmatprep.subr.mxu0 0.0
    %662 = vmatpush1.msra.mxu0 %v631
    %663 = vmatprep.subr.mxu0 0.0
    %664 = vmatpush1.msra.mxu0 %v632
    %665 = vmatprep.subr.mxu0 0.0
    %666 = vmatpush1.msra.mxu0 0.0
    %667 = vmatprep.subr.mxu0 0.0
    %668 = vmatpush1.msra.mxu0 0.0
    %669 = vmatprep.subr.mxu0 0.0
    %670 = vmatpush1.msra.mxu0 0.0
    %671 = vmatprep.subr.mxu0 0.0
    %672 = vmatpush1.msra.mxu0 0.0
    %673 = vmatprep.subr.mxu0 0.0
    %674 = vmatpush1.msra.mxu0 0.0
    %675 = vmatprep.subr.mxu0 0.0
    %676 = vmatpush1.msra.mxu0 0.0
    %677 = vmatprep.subr.mxu0 0.0
    %678 = vmatpush1.msra.mxu0 0.0
    %679 = vmatprep.subr.mxu0 0.0
    %680 = vmatpush1.msra.mxu0 0.0
    %681 = vmatprep.subr.mxu0 0.0
    %682 = vmatpush1.msra.mxu0 0.0
    %683 = vmatprep.subr.mxu0 0.0
    %684 = vmatpush1.msra.mxu0 0.0
    %685 = vmatprep.subr.mxu0 0.0
    %686 = vmatpush1.msra.mxu0 0.0
    %687 = vmatprep.subr.mxu0 0.0
    %688 = vmatpush1.msra.mxu0 0.0
    %689 = vmatprep.subr.mxu0 0.0
    %690 = vmatpush1.msra.mxu0 0.0
    %691 = vmatprep.subr.mxu0 0.0
    %692 = vmatpush1.msra.mxu0 0.0
    %693 = vmatprep.subr.mxu0 0.0
    %694 = vmatpush1.msra.mxu0 0.0
    %695 = vmatprep.subr.mxu0 0.0
    %696 = vmatpush1.msra.mxu0 0.0
    %697 = vmatprep.mubr.f32.mxu0 0.0
    %698 = vmatmul.mubr.f32.gmra.mrb[0].mxu0 %v608
    %v699 = vpop.f32.mrb[0].mxu0
    %v700 = vadd.f32 0.0, %v699
    %v701 = vpop.f32.mrb[0].mxu0
    %702 = vmatprep.mubr.f32.mxu0 0.0
    %703 = vmatmul.mubr.f32.gmra.mrb[0].mxu0 %v609
    %v704 = vpop.f32.mrb[0].mxu0
    %v705 = vadd.f32 0.0, %v704
    %v706 = vpop.f32.mrb[0].mxu0
    %707 = vmatprep.mubr.f32.mxu0 0.0
    %708 = vmatmul.mubr.f32.gmra.mrb[0].mxu0 %v610
    %v709 = vpop.f32.mrb[0].mxu0
    %v710 = vadd.f32 0.0, %v709
    %v711 = vpop.f32.mrb[0].mxu0
    %712 = vmatprep.mubr.f32.mxu0 0.0
    %713 = vmatmul.mubr.f32.gmra.mrb[0].mxu0 %v611
    %v714 = vpop.f32.mrb[0].mxu0
    %v715 = vadd.f32 0.0, %v714
    %v716 = vpop.f32.mrb[0].mxu0
    %717 = vmatprep.mubr.f32.mxu0 0.0
    %718 = vmatmul.mubr.f32.gmra.mrb[0].mxu0 %v612
    %v719 = vpop.f32.mrb[0].mxu0
    %v720 = vadd.f32 0.0, %v719
    %v721 = vpop.f32.mrb[0].mxu0
    %722 = vmatprep.mubr.f32.mxu0 0.0
    %723 = vmatmul.mubr.f32.gmra.mrb[0].mxu0 %v613
    %v724 = vpop.f32.mrb[0].mxu0
    %v725 = vadd.f32 0.0, %v724
    %v726 = vpop.f32.mrb[0].mxu0
    %727 = vmatprep.mubr.f32.mxu0 0.0
    %728 = vmatmul.mubr.f32.gmra.mrb[0].mxu0 %v614
    %v729 = vpop.f32.mrb[0].mxu0
    %v730 = vadd.f32 0.0, %v729
    %v731 = vpop.f32.mrb[0].mxu0
    %732 = vmatprep.mubr.f32.mxu0 0.0
    %733 = vmatmul.mubr.f32.gmra.mrb[0].mxu0 %v615
    %v734 = vpop.f32.mrb[0].mxu0
    %v735 = vadd.f32 0.0, %v734
    %v736 = vpop.f32.mrb[0].mxu0
    %737 = vdwg.mxu0
    %s738 = scalar_lea.vmem %s3, 2
    %v739 = vld [vmem:[%s738] sm:$0x1]
    %v741 = vlaneseq
    %v742 = vshrl.u32 %v741, 7
    %v743 = vsub.s32 0, %v742
    %v744 = vrot.slane %v739, %v743
    %746 = vmatprep.subr.mxu0 0.0
    %747 = vmatpush1.msra.mxu0 %v700
    %748 = vmatprep.subr.mxu0 0.0
    %749 = vmatpush1.msra.mxu0 %v705
    %750 = vmatprep.subr.mxu0 0.0
    %751 = vmatpush1.msra.mxu0 %v710
    %752 = vmatprep.subr.mxu0 0.0
    %753 = vmatpush1.msra.mxu0 %v715
    %754 = vmatprep.subr.mxu0 0.0
    %755 = vmatpush1.msra.mxu0 %v720
    %756 = vmatprep.subr.mxu0 0.0
    %757 = vmatpush1.msra.mxu0 %v725
    %758 = vmatprep.subr.mxu0 0.0
    %759 = vmatpush1.msra.mxu0 %v730
    %760 = vmatprep.subr.mxu0 0.0
    %761 = vmatpush1.msra.mxu0 %v735
    %762 = vmatprep.subr.mxu0 0.0
    %763 = vmatpush1.msra.mxu0 0.0
    %764 = vmatprep.subr.mxu0 0.0
    %765 = vmatpush1.msra.mxu0 0.0
    %766 = vmatprep.subr.mxu0 0.0
    %767 = vmatpush1.msra.mxu0 0.0
    %768 = vmatprep.subr.mxu0 0.0
    %769 = vmatpush1.msra.mxu0 0.0
    %770 = vmatprep.subr.mxu0 0.0
    %771 = vmatpush1.msra.mxu0 0.0
    %772 = vmatprep.subr.mxu0 0.0
    %773 = vmatpush1.msra.mxu0 0.0
    %774 = vmatprep.subr.mxu0 0.0
    %775 = vmatpush1.msra.mxu0 0.0
    %776 = vmatprep.subr.mxu0 0.0
    %777 = vmatpush1.msra.mxu0 0.0
    %778 = vmatprep.subr.mxu0 0.0
    %779 = vmatpush1.msra.mxu0 0.0
    %780 = vmatprep.subr.mxu0 0.0
    %781 = vmatpush1.msra.mxu0 0.0
    %782 = vmatprep.subr.mxu0 0.0
    %783 = vmatpush1.msra.mxu0 0.0
    %784 = vmatprep.subr.mxu0 0.0
    %785 = vmatpush1.msra.mxu0 0.0
    %786 = vmatprep.subr.mxu0 0.0
    %787 = vmatpush1.msra.mxu0 0.0
    %788 = vmatprep.subr.mxu0 0.0
    %789 = vmatpush1.msra.mxu0 0.0
    %790 = vmatprep.subr.mxu0 0.0
    %791 = vmatpush1.msra.mxu0 0.0
    %792 = vmatprep.subr.mxu0 0.0
    %793 = vmatpush1.msra.mxu0 0.0
    %794 = vmatprep.subr.mxu0 0.0
    %795 = vmatpush1.msra.mxu0 0.0
    %796 = vmatprep.subr.mxu0 0.0
    %797 = vmatpush1.msra.mxu0 0.0
    %798 = vmatprep.subr.mxu0 0.0
    %799 = vmatpush1.msra.mxu0 0.0
    %800 = vmatprep.subr.mxu0 0.0
    %801 = vmatpush1.msra.mxu0 0.0
    %802 = vmatprep.subr.mxu0 0.0
    %803 = vmatpush1.msra.mxu0 0.0
    %804 = vmatprep.subr.mxu0 0.0
    %805 = vmatpush1.msra.mxu0 0.0
    %806 = vmatprep.subr.mxu0 0.0
    %807 = vmatpush1.msra.mxu0 0.0
    %808 = vmatprep.subr.mxu0 0.0
    %809 = vmatpush1.msra.mxu0 0.0
    %810 = vmatprep.mubr.f32.mxu0 0.0
    %811 = vmatmul.mubr.f32.gmra.mrb[0].mxu0 %v205
    %v812 = vpop.f32.mrb[0].mxu0
    %v813 = vadd.f32 %v744, %v812
    %v814 = vpop.f32.mrb[0].mxu0
    %815 = vmatprep.mubr.f32.mxu0 0.0
    %816 = vmatmul.mubr.f32.gmra.mrb[0].mxu0 %v208
    %v817 = vpop.f32.mrb[0].mxu0
    %v818 = vadd.f32 %v744, %v817
    %v819 = vpop.f32.mrb[0].mxu0
    %820 = vmatprep.mubr.f32.mxu0 0.0
    %821 = vmatmul.mubr.f32.gmra.mrb[0].mxu0 %v211
    %v822 = vpop.f32.mrb[0].mxu0
    %v823 = vadd.f32 %v744, %v822
    %v824 = vpop.f32.mrb[0].mxu0
    %825 = vmatprep.mubr.f32.mxu0 0.0
    %826 = vmatmul.mubr.f32.gmra.mrb[0].mxu0 %v214
    %v827 = vpop.f32.mrb[0].mxu0
    %v828 = vadd.f32 %v744, %v827
    %v829 = vpop.f32.mrb[0].mxu0
    %830 = vmatprep.mubr.f32.mxu0 0.0
    %831 = vmatmul.mubr.f32.gmra.mrb[0].mxu0 %v217
    %v832 = vpop.f32.mrb[0].mxu0
    %v833 = vadd.f32 %v744, %v832
    %v834 = vpop.f32.mrb[0].mxu0
    %835 = vmatprep.mubr.f32.mxu0 0.0
    %836 = vmatmul.mubr.f32.gmra.mrb[0].mxu0 %v220
    %v837 = vpop.f32.mrb[0].mxu0
    %v838 = vadd.f32 %v744, %v837
    %v839 = vpop.f32.mrb[0].mxu0
    %840 = vmatprep.mubr.f32.mxu0 0.0
    %841 = vmatmul.mubr.f32.gmra.mrb[0].mxu0 %v223
    %v842 = vpop.f32.mrb[0].mxu0
    %v843 = vadd.f32 %v744, %v842
    %v844 = vpop.f32.mrb[0].mxu0
    %845 = vmatprep.mubr.f32.mxu0 0.0
    %846 = vmatmul.mubr.f32.gmra.mrb[0].mxu0 %v226
    %v847 = vpop.f32.mrb[0].mxu0
    %v848 = vadd.f32 %v744, %v847
    %v849 = vpop.f32.mrb[0].mxu0
    %850 = vdwg.mxu0
    %vm851 = vcmp.gt.f32.partialorder %v813, 0.0
    %vm852 = vcmp.gt.f32.partialorder %v818, 0.0
    %vm853 = vcmp.gt.f32.partialorder %v823, 0.0
    %vm854 = vcmp.gt.f32.partialorder %v828, 0.0
    %vm855 = vcmp.gt.f32.partialorder %v833, 0.0
    %vm856 = vcmp.gt.f32.partialorder %v838, 0.0
    %vm857 = vcmp.gt.f32.partialorder %v843, 0.0
    %vm858 = vcmp.gt.f32.partialorder %v848, 0.0
    %v859 = vmul.f32 %v813, 0.25
    %v860 = vmul.f32 %v818, 0.25
    %v861 = vmul.f32 %v823, 0.25
    %v862 = vmul.f32 %v828, 0.25
    %v863 = vmul.f32 %v833, 0.25
    %v864 = vmul.f32 %v838, 0.25
    %v865 = vmul.f32 %v843, 0.25
    %v866 = vmul.f32 %v848, 0.25
    %v867 = vsel %vm851, %v813, %v859
    %v868 = vsel %vm852, %v818, %v860
    %v869 = vsel %vm853, %v823, %v861
    %v870 = vsel %vm854, %v828, %v862
    %v871 = vsel %vm855, %v833, %v863
    %v872 = vsel %vm856, %v838, %v864
    %v873 = vsel %vm857, %v843, %v865
    %v874 = vsel %vm858, %v848, %v866
    %875 = vst [vmem:[#allocation8] sm:$0xff] %v867
    %876 = vst [vmem:[#allocation8 + $0x8] sm:$0xff] %v868
    %877 = vst [vmem:[#allocation8 + $0x10] sm:$0xff] %v869
    %878 = vst [vmem:[#allocation8 + $0x18] sm:$0xff] %v870
    %879 = vst [vmem:[#allocation8 + $0x20] sm:$0xff] %v871
    %880 = vst [vmem:[#allocation8 + $0x28] sm:$0xff] %v872
    %881 = vst [vmem:[#allocation8 + $0x30] sm:$0xff] %v873
    %882 = vst [vmem:[#allocation8 + $0x38] sm:$0xff] %v874
    // Predicated region
    $region30: #{tpu_custom_call.1} parent=1 // pred_check
      _
    $region31: #{tpu_custom_call.1} parent=1 // pred_check_branch
      %884 = sbr.rel (0) target = $region33
    $region32: #{tpu_custom_call.1} parent=1 // pred_region
      %s886 = ssub.s32 1024, 1024
      %887 = vsyncadd [#allocation4], %s886
      %s888 = sshll.u32 [#allocation8], 4
      %s889 = int_to_ptr.vmem [resolvable:$true] %s888
      %894 = dma.vmem_to_hbm [thread:$0]  %s889, 1024, %s4, [#allocation4], 128, 128, 8
    $region33: #{tpu_custom_call.1} parent=1 // pred_fallthru
      _
    // Predicated region
    $region34: #{tpu_custom_call.1} parent=1 // pred_check
      _
    $region35: #{tpu_custom_call.1} parent=1 // pred_check_branch
      %896 = sbr.rel (0) target = $region37
    $region36: #{tpu_custom_call.1} parent=1 // pred_region
      %897 = dma.done [#allocation4], 1024
    $region37: #{tpu_custom_call.1} parent=1 // pred_fallthru
      _
    %898 = vsyncpa [#allocation3], 1
    %899 = vsyncpa [#allocation6], 1
    %900 = vsyncpa [#allocation4], 1

</llo_original>
